<compile_context>
chip_gen: v7x
topology: tpu7x:2x2x1
jax: 0.10.0
libtpu: 0.0.40
codegen_flags: <defaults>
</compile_context>

<pallas_src>
import functools

import jax
import jax.numpy as jnp
from jax.experimental import pallas as pl
from jax.experimental.pallas import tpu as pltpu


def _pick_tile_hw(hw, max_tile=512):
    """Largest divisor of hw that is <= max_tile and a multiple of 8 (or hw itself)."""
    if hw <= max_tile:
        return hw
    best = None
    for t in range(8, max_tile + 1, 8):
        if hw % t == 0:
            best = t
    return best if best is not None else hw


def _ee_ramp_kernel(patch_ref, wconv_ref, shift_ref, fcw_ref, fcb_ref,
                    out_ref, pooled_ref, *, hw, tile_hw, needs_mask):
    # patch_ref: (1, TILE_HW, K)     bf16  im2col patches for one image tile
    # wconv_ref: (K, C_out_p)        bf16  BN-scale-folded conv weights (zero-padded cols)
    # shift_ref: (1, C_out_p)        f32   folded conv-bias + BN shift
    # fcw_ref:   (C_out_p, NC_p)     bf16  fc weights pre-scaled by 1/(H*W), zero-padded
    # fcb_ref:   (1, NC_p)           f32   fc bias, zero-padded
    # out_ref:   (1, 1, NC_p)        f32   logits for this image
    # pooled_ref:(1, C_out_p)        f32   per-image pooled-sum accumulator (scratch)
    t = pl.program_id(1)

    @pl.when(t == 0)
    def _init():
        pooled_ref[...] = jnp.zeros_like(pooled_ref)

    # Conv (+ folded BN scale) as one MXU matmul with f32 accumulation.
    acc = jnp.dot(patch_ref[0], wconv_ref[...],
                  preferred_element_type=jnp.float32)            # (TILE_HW, C_out_p)
    acc = acc + shift_ref[...]                                    # bias + BN shift (f32)
    y = jnp.maximum(acc, 0.0)                                     # ReLU

    if needs_mask:
        # Zero out rows that fall beyond the real H*W (only when HW was padded).
        row = jax.lax.broadcasted_iota(jnp.int32, y.shape, 0) + t * tile_hw
        y = jnp.where(row < hw, y, 0.0)

    # Global sum-pool contribution of this tile: cheap sublane reduction.
    pooled_ref[...] += jnp.sum(y, axis=0, keepdims=True)          # (1, C_out_p)

    @pl.when(t == pl.num_programs(1) - 1)
    def _finalize():
        # Linear head; fc weights already carry the 1/(H*W) mean-pool factor.
        logits = jnp.dot(pooled_ref[...].astype(jnp.bfloat16), fcw_ref[...],
                         preferred_element_type=jnp.float32) + fcb_ref[...]
        out_ref[0] = logits.astype(out_ref.dtype)


def earlyexit_ramp_forward(x_nchw, conv_w, conv_b, bn_gamma, bn_beta,
                           bn_mean, bn_var, fc_w, fc_b, eps=1e-5):
    """x_nchw: (N, C_in, H, W); conv_w: (C_out, C_in, 3, 3) as in PyTorch."""
    N, C_in, H, W = x_nchw.shape
    C_out = conv_w.shape[0]
    num_classes = fc_w.shape[0]
    HW = H * W
    K = 9 * C_in

    def _round_up(v, m):
        return (v + m - 1) // m * m

    # Lane-dense channel padding (unmasked MXU result lanes / output stores).
    C_out_p = _round_up(C_out, 128)
    NC_p = _round_up(num_classes, 128)

    TILE_HW = _pick_tile_hw(HW)
    HW_pad = _round_up(HW, TILE_HW)
    n_tiles = HW_pad // TILE_HW
    needs_mask = HW_pad != HW

    # ---- wrapper-side im2col in bf16 (NCHW -> NHWC, pad=1, 3x3 patches) ----
    x = jnp.transpose(x_nchw, (0, 2, 3, 1)).astype(jnp.bfloat16)        # (N,H,W,C_in)
    x_pad = jnp.pad(x, ((0, 0), (1, 1), (1, 1), (0, 0)))
    shards = [x_pad[:, dy:dy + H, dx:dx + W, :]
              for dy in range(3) for dx in range(3)]                    # [dy,dx,cin] order
    patches = jnp.concatenate(shards, axis=-1).reshape(N, HW, K)
    if needs_mask:
        patches = jnp.pad(patches, ((0, 0), (0, HW_pad - HW), (0, 0)))

    # ---- fold conv bias + BN (inference) into per-channel scale/shift ----
    scale = bn_gamma / jnp.sqrt(bn_var + eps)                           # (C_out,)
    shift = bn_beta + (conv_b - bn_mean) * scale                        # (C_out,)
    w_hwio = jnp.transpose(conv_w, (2, 3, 1, 0)).astype(jnp.float32)    # (3,3,C_in,C_out)
    w_mat = (w_hwio.reshape(K, C_out) * scale[None, :]).astype(jnp.bfloat16)
    w_mat = jnp.pad(w_mat, ((0, 0), (0, C_out_p - C_out)))              # (K, C_out_p)
    shift_p = jnp.pad(shift.astype(jnp.float32),
                      (0, C_out_p - C_out)).reshape(1, C_out_p)

    # ---- fold the 1/(H*W) mean-pool factor into the fc weights ----
    fcw = (fc_w.T.astype(jnp.float32) / float(HW)).astype(jnp.bfloat16)  # (C_out, NC)
    fcw = jnp.pad(fcw, ((0, C_out_p - C_out), (0, NC_p - num_classes)))  # (C_out_p, NC_p)
    fcb = jnp.pad(fc_b.astype(jnp.float32),
                  (0, NC_p - num_classes)).reshape(1, NC_p)

    kernel = functools.partial(_ee_ramp_kernel, hw=HW, tile_hw=TILE_HW,
                               needs_mask=needs_mask)

    # Scoped-VMEM budget: 2x double-buffered patch tile + resident weights + small bits.
    vmem_bytes = (2 * TILE_HW * K * 2          # patch tile, bf16, double-buffered
                  + K * C_out_p * 2            # conv weights
                  + 8 * C_out_p * 4            # shift (sublane-padded)
                  + C_out_p * NC_p * 2         # fc weights
                  + 8 * NC_p * 4               # fc bias
                  + 2 * 8 * NC_p * 4           # output block
                  + 8 * C_out_p * 4)           # pooled scratch
    vmem_limit = int(min(100 * 1024 * 1024, max(32 * 1024 * 1024, 2 * vmem_bytes)))

    cost = pl.CostEstimate(
        flops=2 * N * HW_pad * K * C_out_p + 2 * N * C_out_p * NC_p,
        transcendentals=0,
        bytes_accessed=int(patches.size * 2 + w_mat.size * 2 + fcw.size * 2
                           + shift_p.size * 4 + fcb.size * 4 + N * NC_p * 4))

    out = pl.pallas_call(
        kernel,
        out_shape=jax.ShapeDtypeStruct((N, 1, NC_p), jnp.float32),
        grid_spec=pltpu.PrefetchScalarGridSpec(
            num_scalar_prefetch=0,
            grid=(N, n_tiles),
            in_specs=[
                pl.BlockSpec((1, TILE_HW, K), lambda n, t: (n, t, 0)),
                pl.BlockSpec((K, C_out_p), lambda n, t: (0, 0)),
                pl.BlockSpec((1, C_out_p), lambda n, t: (0, 0)),
                pl.BlockSpec((C_out_p, NC_p), lambda n, t: (0, 0)),
                pl.BlockSpec((1, NC_p), lambda n, t: (0, 0)),
            ],
            out_specs=pl.BlockSpec((1, 1, NC_p), lambda n, t: (n, 0, 0)),
            scratch_shapes=[pltpu.VMEM((1, C_out_p), jnp.float32)],
        ),
        compiler_params=pltpu.CompilerParams(
            dimension_semantics=("parallel", "arbitrary"),
            vmem_limit_bytes=vmem_limit),
        cost_estimate=cost,
    )(patches, w_mat, shift_p, fcw, fcb)

    return out[:, 0, :num_classes]


def _reference(x_nchw, conv_w, conv_b, gamma, beta, mean, var, fc_w, fc_b, eps=1e-5):
    y = jax.lax.conv_general_dilated(
        x_nchw, conv_w, window_strides=(1, 1), padding="SAME",
        dimension_numbers=("NCHW", "OIHW", "NCHW"))
    y = y + conv_b[None, :, None, None]
    y = gamma[None, :, None, None] * (y - mean[None, :, None, None]) \
        / jnp.sqrt(var[None, :, None, None] + eps) + beta[None, :, None, None]
    y = jnp.maximum(y, 0.0)
    p = jnp.mean(y, axis=(2, 3))
    return p @ fc_w.T + fc_b


if __name__ == "__main__":
    # Small shapes consistent with the module: num_feature=32 -> conv 32->16
    N, C_in, H, W = 2, 32, 8, 8
    C_out, num_classes = C_in // 2, 10

    key = jax.random.PRNGKey(0)
    ks = jax.random.split(key, 8)
    x = jax.random.normal(ks[0], (N, C_in, H, W), jnp.float32)
    conv_w = jax.random.normal(ks[1], (C_out, C_in, 3, 3), jnp.float32) * 0.05
    conv_b = jax.random.normal(ks[2], (C_out,), jnp.float32) * 0.05
    bn_gamma = 1.0 + 0.1 * jax.random.normal(ks[3], (C_out,), jnp.float32)
    bn_beta = 0.1 * jax.random.normal(ks[4], (C_out,), jnp.float32)
    bn_mean = 0.1 * jax.random.normal(ks[5], (C_out,), jnp.float32)
    bn_var = 0.5 + jnp.abs(jax.random.normal(ks[6], (C_out,), jnp.float32))
    fc_w = jax.random.normal(ks[7], (num_classes, C_out), jnp.float32) * 0.1
    fc_b = jnp.linspace(-0.1, 0.1, num_classes, dtype=jnp.float32)

    out = earlyexit_ramp_forward(x, conv_w, conv_b, bn_gamma, bn_beta,
                                 bn_mean, bn_var, fc_w, fc_b)
    out = jax.block_until_ready(out)

    ref = _reference(x, conv_w, conv_b, bn_gamma, bn_beta, bn_mean, bn_var,
                     fc_w, fc_b)
    assert out.shape == (N, num_classes)
    # bf16 matmul inputs with f32 accumulation -> slightly looser tolerance than pure f32.
    assert jnp.allclose(out, ref, rtol=2e-2, atol=2e-2), "mismatch vs JAX reference"

    print("KERNEL_OK")
</pallas_src>

<mosaic_0001>
module attributes {stable_mosaic.version = 11 : i64} {
  func.func @_ee_ramp_kernel(%arg0: i32, %arg1: i32, %arg2: memref<1x64x288xbf16, #tpu.memory_space<vmem>>, %arg3: memref<288x128xbf16, #tpu.memory_space<vmem>>, %arg4: memref<1x128xf32, #tpu.memory_space<vmem>>, %arg5: memref<128x128xbf16, #tpu.memory_space<vmem>>, %arg6: memref<1x128xf32, #tpu.memory_space<vmem>>, %arg7: memref<1x1x128xf32, #tpu.memory_space<vmem>>, %arg8: memref<1x128xf32, #tpu.memory_space<vmem>>) attributes {dimension_semantics = [#tpu.dimension_semantics<parallel>, #tpu.dimension_semantics<arbitrary>], iteration_bounds = array<i64: 2, 1>, scalar_prefetch = 0 : i64, scratch_operands = 1 : i64, tpu.core_type = #tpu.core_type<tc>, window_params = [{transform_indices = @transform_0, window_bounds = array<i64: 1, 64, 288>}, {pipeline_mode = #tpu.pipeline_mode<synchronous>, transform_indices = @transform_1, window_bounds = array<i64: 288, 128>}, {pipeline_mode = #tpu.pipeline_mode<synchronous>, transform_indices = @transform_2, window_bounds = array<i64: 1, 128>}, {pipeline_mode = #tpu.pipeline_mode<synchronous>, transform_indices = @transform_3, window_bounds = array<i64: 128, 128>}, {pipeline_mode = #tpu.pipeline_mode<synchronous>, transform_indices = @transform_4, window_bounds = array<i64: 1, 128>}, {transform_indices = @transform_5, window_bounds = array<i64: 1, 1, 128>}]} {
    %c0_i32 = arith.constant 0 : i32
    %0 = arith.cmpi eq, %arg1, %c0_i32 : i32
    %1 = arith.extui %0 : i1 to i32
    %c0_i32_0 = arith.constant 0 : i32
    %2 = arith.cmpi ne, %1, %c0_i32_0 : i32
    scf.if %2 {
      %cst_15 = arith.constant 0.000000e+00 : f32
      %20 = vector.broadcast %cst_15 : f32 to vector<1x128xf32>
      %c0_16 = arith.constant 0 : index
      %c0_17 = arith.constant 0 : index
      %21 = vector.load %arg8[%c0_16, %c0_17] : memref<1x128xf32, #tpu.memory_space<vmem>>, vector<1x128xf32>
      tpu.vector_store %arg8[%c0_16, %c0_17], %20 {strides = array<i32>} : memref<1x128xf32, #tpu.memory_space<vmem>>, vector<1x128xf32>,
    } else {
    }
    %c0 = arith.constant 0 : index
    %c0_1 = arith.constant 0 : index
    %c0_2 = arith.constant 0 : index
    %3 = vector.load %arg2[%c0, %c0_1, %c0_2] : memref<1x64x288xbf16, #tpu.memory_space<vmem>>, vector<1x64x288xbf16>
    %4 = vector.shape_cast %3 : vector<1x64x288xbf16> to vector<64x288xbf16>
    %c0_3 = arith.constant 0 : index
    %c0_4 = arith.constant 0 : index
    %5 = vector.load %arg3[%c0_3, %c0_4] : memref<288x128xbf16, #tpu.memory_space<vmem>>, vector<288x128xbf16>
    %cst = arith.constant dense<0.000000e+00> : vector<64x128xf32>
    %6 = tpu.matmul %4, %5, %cst {dimension_numbers = #tpu.dot_dimension_numbers<[1], [0], [0], [1], [0, 0, 1, 1], [], []>} : vector<64x288xbf16>, vector<288x128xbf16>, vector<64x128xf32> -> vector<64x128xf32>
    %c0_5 = arith.constant 0 : index
    %c0_6 = arith.constant 0 : index
    %7 = vector.load %arg4[%c0_5, %c0_6] : memref<1x128xf32, #tpu.memory_space<vmem>>, vector<1x128xf32>
    %8 = vector.broadcast %7 : vector<1x128xf32> to vector<64x128xf32>
    %9 = arith.addf %6, %8 : vector<64x128xf32>
    %cst_7 = arith.constant 0.000000e+00 : f32
    %10 = vector.broadcast %cst_7 : f32 to vector<64x128xf32>
    %11 = arith.maximumf %9, %10 : vector<64x128xf32>
    %c0_8 = arith.constant 0 : index
    %c0_9 = arith.constant 0 : index
    %12 = vector.load %arg8[%c0_8, %c0_9] : memref<1x128xf32, #tpu.memory_space<vmem>>, vector<1x128xf32>
    %cst_10 = arith.constant dense<0.000000e+00> : vector<128xf32>
    %13 = vector.multi_reduction <add>, %11, %cst_10 [0] : vector<64x128xf32> to vector<128xf32>
    %14 = vector.shape_cast %13 : vector<128xf32> to vector<1x128xf32>
    %15 = arith.addf %12, %14 : vector<1x128xf32>
    %c0_11 = arith.constant 0 : index
    %c0_12 = arith.constant 0 : index
    %16 = vector.load %arg8[%c0_11, %c0_12] : memref<1x128xf32, #tpu.memory_space<vmem>>, vector<1x128xf32>
    tpu.vector_store %arg8[%c0_11, %c0_12], %15 {strides = array<i32>} : memref<1x128xf32, #tpu.memory_space<vmem>>, vector<1x128xf32>,
    %c0_i32_13 = arith.constant 0 : i32
    %17 = arith.cmpi eq, %arg1, %c0_i32_13 : i32
    %18 = arith.extui %17 : i1 to i32
    %c0_i32_14 = arith.constant 0 : i32
    %19 = arith.cmpi ne, %18, %c0_i32_14 : i32
    scf.if %19 {
      %c0_15 = arith.constant 0 : index
      %c0_16 = arith.constant 0 : index
      %20 = vector.load %arg8[%c0_15, %c0_16] : memref<1x128xf32, #tpu.memory_space<vmem>>, vector<1x128xf32>
      %21 = arith.truncf %20 : vector<1x128xf32> to vector<1x128xbf16>
      %c0_17 = arith.constant 0 : index
      %c0_18 = arith.constant 0 : index
      %22 = vector.load %arg5[%c0_17, %c0_18] : memref<128x128xbf16, #tpu.memory_space<vmem>>, vector<128x128xbf16>
      %cst_19 = arith.constant dense<0.000000e+00> : vector<1x128xf32>
      %23 = tpu.matmul %21, %22, %cst_19 {dimension_numbers = #tpu.dot_dimension_numbers<[1], [0], [0], [1], [0, 0, 1, 1], [], []>} : vector<1x128xbf16>, vector<128x128xbf16>, vector<1x128xf32> -> vector<1x128xf32>
      %c0_20 = arith.constant 0 : index
      %c0_21 = arith.constant 0 : index
      %24 = vector.load %arg6[%c0_20, %c0_21] : memref<1x128xf32, #tpu.memory_space<vmem>>, vector<1x128xf32>
      %25 = arith.addf %23, %24 : vector<1x128xf32>
      %c0_22 = arith.constant 0 : index
      %c0_23 = arith.constant 0 : index
      %c0_24 = arith.constant 0 : index
      %26 = vector.load %arg7[%c0_22, %c0_23, %c0_24] : memref<1x1x128xf32, #tpu.memory_space<vmem>>, vector<1x1x128xf32>
      %27 = vector.shape_cast %26 : vector<1x1x128xf32> to vector<1x128xf32>
      %28 = vector.shape_cast %25 : vector<1x128xf32> to vector<1x1x128xf32>
      tpu.vector_store %arg7[%c0_22, %c0_23, %c0_24], %28 {strides = array<i32>} : memref<1x1x128xf32, #tpu.memory_space<vmem>>, vector<1x1x128xf32>,
    } else {
    }
    return
  }
  func.func @transform_0(%arg0: i32, %arg1: i32) -> (i32, i32, i32) {
    %c0_i32 = arith.constant 0 : i32
    %c0_i32_0 = arith.constant 0 : i32
    return %arg0, %arg1, %c0_i32 : i32, i32, i32
  }
  func.func @transform_1(%arg0: i32, %arg1: i32) -> (i32, i32) {
    %c0_i32 = arith.constant 0 : i32
    %c0_i32_0 = arith.constant 0 : i32
    %c0_i32_1 = arith.constant 0 : i32
    return %c0_i32, %c0_i32_0 : i32, i32
  }
  func.func @transform_2(%arg0: i32, %arg1: i32) -> (i32, i32) {
    %c0_i32 = arith.constant 0 : i32
    %c0_i32_0 = arith.constant 0 : i32
    %c0_i32_1 = arith.constant 0 : i32
    return %c0_i32, %c0_i32_0 : i32, i32
  }
  func.func @transform_3(%arg0: i32, %arg1: i32) -> (i32, i32) {
    %c0_i32 = arith.constant 0 : i32
    %c0_i32_0 = arith.constant 0 : i32
    %c0_i32_1 = arith.constant 0 : i32
    return %c0_i32, %c0_i32_0 : i32, i32
  }
  func.func @transform_4(%arg0: i32, %arg1: i32) -> (i32, i32) {
    %c0_i32 = arith.constant 0 : i32
    %c0_i32_0 = arith.constant 0 : i32
    %c0_i32_1 = arith.constant 0 : i32
    return %c0_i32, %c0_i32_0 : i32, i32
  }
  func.func @transform_5(%arg0: i32, %arg1: i32) -> (i32, i32, i32) {
    %c0_i32 = arith.constant 0 : i32
    %c0_i32_0 = arith.constant 0 : i32
    %c0_i32_1 = arith.constant 0 : i32
    return %arg0, %c0_i32, %c0_i32_0 : i32, i32, i32
  }
}

</mosaic_0001>

<llo_original>
// kernel: tpu_custom_call.1
$region0: #{tpu_custom_call.1}
  #allocation0 [shape = 'u32[]', space=smem, size = 0x4, offset = 0x4, fixed_abs, tag = 'smem constant byte address 0x4 - core index']
  #allocation1 [shape = 'u32[144,128]{1,0:T(1,128)}', space=vmem, size = 0x12000, scoped, tag = 'internal scratch']
  #allocation2 [shape = 'f32[1,128]{1,0:T(1,128)}', space=vmem, size = 0x200, scoped, tag = 'scratch operand']
  %s0 = inlined_call_operand.hbm [shape: bf16[2,64,288], index: 0, kind: input, shape index: {}]
  %s1 = inlined_call_operand.hbm [shape: bf16[288,128], index: 1, kind: input, shape index: {}]
  %s2 = inlined_call_operand.vmem [shape: f32[1,128], index: 2, kind: input, shape index: {}]
  %s3 = inlined_call_operand.hbm [shape: bf16[128,128], index: 3, kind: input, shape index: {}]
  %s4 = inlined_call_operand.vmem [shape: f32[1,128], index: 4, kind: input, shape index: {}]
  %s5 = inlined_call_operand.hbm [shape: f32[2,1,128], index: 5, kind: output, shape index: {}]
  %s6 = sld [smem:[#allocation0]]
  $region73: #{tpu_custom_call.1} parent=0
    _
  %s8 = ssub.s32 1, %s6
  %s9 = scalar_select 0, %s8, %s6
  $region1: #{tpu_custom_call.1} parent=0
    #allocation3 [shape = 'u8[98304]{0}', space=vmem, size = 0x18000, scoped, tag = 'input window, operand 0']
    #allocation4 [shape = 's32[2]{0}', space=sflag, size = 0x8, scoped, tag = 'scoped memory for tpu_custom_call.1']
    #allocation5 [shape = 's32[2]{0}', space=sflag, size = 0x8, scoped, tag = 'scoped memory for tpu_custom_call.1']
    #allocation6 [shape = 'u8[73728]{0}', space=vmem, size = 0x12000, scoped, tag = 'input window, operand 1, single buffered']
    #allocation7 [shape = 's32[1]{0}', space=sflag, size = 0x4, scoped, tag = 'scoped memory for tpu_custom_call.1']
    #allocation8 [shape = 'u8[32768]{0}', space=vmem, size = 0x8000, scoped, tag = 'input window, operand 3, single buffered']
    #allocation9 [shape = 'u8[1024]{0}', space=vmem, size = 0x400, scoped, tag = 'output window, operand 0']
    %10 = vsyncpa [#allocation4], 0
    %s11 = scalar_lea.sflag [#allocation4], 1
    %12 = vsyncpa %s11, 0
    %13 = vsyncpa [#allocation7], 0
    %14 = vsyncpa [#allocation5], 0
    %s15 = scalar_lea.sflag [#allocation5], 1
    %16 = vsyncpa %s15, 0
    loop: start=0, step=1, limit=4
    $region2: #{tpu_custom_call.1} parent=1 // loop_pre_header
      _
    $region3: #{tpu_custom_call.1} parent=1 // loop_header
      %s18 = sphi 0, %s22
      %p19 = scmp.ge.s32.totalorder %s18, 4
      %s25 = sphi 0, %s37
      %s26 = sphi 0, %s33
      %s27 = sphi 0, %s25
      %s28 = sphi 0, %s26
      %s29 = sphi 0, %s27
      %s30 = sphi 0, %s28
      %s42 = sphi 0, %s44
      %s45 = sphi 0, %s42
      %s46 = sphi 0, %s45
      %s62 = sphi 0, %s46
      %s66 = sphi 0, %s66
      %s68 = sphi 0, %s66
      %s69 = sphi 0, %s68
      %s83 = sphi 0, %s69
      %s87 = sphi 0, %s87
      %s89 = sphi 0, %s87
      %s90 = sphi 0, %s89
      %s104 = sphi 0, %s90
      %s108 = sphi 0, %s108
      %s110 = sphi 0, %s108
      %s111 = sphi 0, %s110
      %s125 = sphi 0, %s111
      %s129 = sphi 0, %s129
      %s131 = sphi 0, %s129
      %s132 = sphi 0, %s131
      %s146 = sphi 0, %s132
      %s152 = sphi 0, %s154
      %s155 = sphi 0, %s152
      %s156 = sphi 0, %s155
      %s172 = sphi 0, %s156
    $region4: #{tpu_custom_call.1} parent=1 // loop_header_branch
      %21 = sbr.rel (%p19) target = $region8
    $region5: #{tpu_custom_call.1} parent=1 // loop_body
      %s23 = ssub.s32 %s18, 1
      %s24 = ssub.s32 %s18, 2
      %s31 = sadd.s32 1, %s26
      %p32 = scmp.ge.s32.totalorder %s31, 1
      %s33 = scalar_select %p32, 0, %s31
      %s34 = sadd.s32 1, %s25
      %s35 = scalar_select %p32, %s34, %s25
      %p36 = scmp.ge.s32.totalorder %s35, 2
      %s37 = scalar_select %p36, 0, %s35
      %s38 = ssub.s32 %s25, %s37
      %s39 = ssub.s32 %s26, %s33
      %s40 = sor.u32 %s38, %s39
      %p41 = scmp.eq.s32.totalorder %s40, 0
      %s43 = sadd.s32 %s42, 1
      %s44 = scalar_select %p41, %s42, %s43
      %p47 = pneg %p41
      %p48 = scmp.eq.s32.totalorder %s18, 1
      %p49 = por %p47, %p48
      %p50 = scmp.ne.s32.totalorder %s42, %s45
      %p51 = scmp.eq.s32.totalorder %s18, 0
      %p52 = por %p50, %p51
      %p53 = scmp.ne.s32.totalorder %s42, %s45
      %p54 = scmp.eq.s32.totalorder %s23, 1
      %p55 = por %p53, %p54
      %p56 = scmp.ne.s32.totalorder %s45, %s46
      %p57 = scmp.eq.s32.totalorder %s23, 0
      %p58 = por %p56, %p57
      %p59 = scmp.ne.s32.totalorder %s45, %s46
      %p60 = scmp.eq.s32.totalorder %s24, 1
      %p61 = por %p59, %p60
      %p63 = scmp.ne.s32.totalorder %s46, %s62
      %p64 = scmp.eq.s32.totalorder %s24, 0
      %p65 = por %p63, %p64
      %s67 = sadd.s32 %s66, 1
      %p70 = scmp.eq.s32.totalorder %s18, 1
      %p71 = scmp.ne.s32.totalorder %s66, %s68
      %p72 = scmp.eq.s32.totalorder %s18, 0
      %p73 = por %p71, %p72
      %p74 = scmp.ne.s32.totalorder %s66, %s68
      %p75 = scmp.eq.s32.totalorder %s23, 1
      %p76 = por %p74, %p75
      %p77 = scmp.ne.s32.totalorder %s68, %s69
      %p78 = scmp.eq.s32.totalorder %s23, 0
      %p79 = por %p77, %p78
      %p80 = scmp.ne.s32.totalorder %s68, %s69
      %p81 = scmp.eq.s32.totalorder %s24, 1
      %p82 = por %p80, %p81
      %p84 = scmp.ne.s32.totalorder %s69, %s83
      %p85 = scmp.eq.s32.totalorder %s24, 0
      %p86 = por %p84, %p85
      %s88 = sadd.s32 %s87, 1
      %p91 = scmp.eq.s32.totalorder %s18, 1
      %p92 = scmp.ne.s32.totalorder %s87, %s89
      %p93 = scmp.eq.s32.totalorder %s18, 0
      %p94 = por %p92, %p93
      %p95 = scmp.ne.s32.totalorder %s87, %s89
      %p96 = scmp.eq.s32.totalorder %s23, 1
      %p97 = por %p95, %p96
      %p98 = scmp.ne.s32.totalorder %s89, %s90
      %p99 = scmp.eq.s32.totalorder %s23, 0
      %p100 = por %p98, %p99
      %p101 = scmp.ne.s32.totalorder %s89, %s90
      %p102 = scmp.eq.s32.totalorder %s24, 1
      %p103 = por %p101, %p102
      %p105 = scmp.ne.s32.totalorder %s90, %s104
      %p106 = scmp.eq.s32.totalorder %s24, 0
      %p107 = por %p105, %p106
      %s109 = sadd.s32 %s108, 1
      %p112 = scmp.eq.s32.totalorder %s18, 1
      %p113 = scmp.ne.s32.totalorder %s108, %s110
      %p114 = scmp.eq.s32.totalorder %s18, 0
      %p115 = por %p113, %p114
      %p116 = scmp.ne.s32.totalorder %s108, %s110
      %p117 = scmp.eq.s32.totalorder %s23, 1
      %p118 = por %p116, %p117
      %p119 = scmp.ne.s32.totalorder %s110, %s111
      %p120 = scmp.eq.s32.totalorder %s23, 0
      %p121 = por %p119, %p120
      %p122 = scmp.ne.s32.totalorder %s110, %s111
      %p123 = scmp.eq.s32.totalorder %s24, 1
      %p124 = por %p122, %p123
      %p126 = scmp.ne.s32.totalorder %s111, %s125
      %p127 = scmp.eq.s32.totalorder %s24, 0
      %p128 = por %p126, %p127
      %s130 = sadd.s32 %s129, 1
      %p133 = scmp.eq.s32.totalorder %s18, 1
      %p134 = scmp.ne.s32.totalorder %s129, %s131
      %p135 = scmp.eq.s32.totalorder %s18, 0
      %p136 = por %p134, %p135
      %p137 = scmp.ne.s32.totalorder %s129, %s131
      %p138 = scmp.eq.s32.totalorder %s23, 1
      %p139 = por %p137, %p138
      %p140 = scmp.ne.s32.totalorder %s131, %s132
      %p141 = scmp.eq.s32.totalorder %s23, 0
      %p142 = por %p140, %p141
      %p143 = scmp.ne.s32.totalorder %s131, %s132
      %p144 = scmp.eq.s32.totalorder %s24, 1
      %p145 = por %p143, %p144
      %p147 = scmp.ne.s32.totalorder %s132, %s146
      %p148 = scmp.eq.s32.totalorder %s24, 0
      %p149 = por %p147, %p148
      %s150 = ssub.s32 %s25, %s37
      %p151 = scmp.eq.s32.totalorder %s150, 0
      %s153 = sadd.s32 %s152, 1
      %s154 = scalar_select %p151, %s152, %s153
      %p157 = pneg %p151
      %p158 = scmp.eq.s32.totalorder %s18, 1
      %p159 = por %p157, %p158
      %p160 = scmp.ne.s32.totalorder %s152, %s155
      %p161 = scmp.eq.s32.totalorder %s18, 0
      %p162 = por %p160, %p161
      %p163 = scmp.ne.s32.totalorder %s152, %s155
      %p164 = scmp.eq.s32.totalorder %s23, 1
      %p165 = por %p163, %p164
      %p166 = scmp.ne.s32.totalorder %s155, %s156
      %p167 = scmp.eq.s32.totalorder %s23, 0
      %p168 = por %p166, %p167
      %p169 = scmp.ne.s32.totalorder %s155, %s156
      %p170 = scmp.eq.s32.totalorder %s24, 1
      %p171 = por %p169, %p170
      %p173 = scmp.ne.s32.totalorder %s156, %s172
      %p174 = scmp.eq.s32.totalorder %s24, 0
      %p175 = por %p173, %p174
      %p176 = scmp.le.s32.totalorder 1, %s18
      %p177 = scmp.lt.s32.totalorder %s18, 3
      %p178 = pnand %p176, %p177
      %p179 = pneg %p178
      // Predicated region
      $region9: #{tpu_custom_call.1} parent=5 // pred_check
        _
      $region10: #{tpu_custom_call.1} parent=5 // pred_check_branch
        %181 = sbr.rel (%p178) target = $region12
      $region11: #{tpu_custom_call.1} parent=5 // pred_region
        %s182 = ssub.s32 %s18, 1
        // Predicated region
        $region13: #{tpu_custom_call.1} parent=11 // pred_check
          %p183 = pneg %p79
        $region14: #{tpu_custom_call.1} parent=11 // pred_check_branch
          %185 = sbr.rel (%p183) target = $region16
        $region15: #{tpu_custom_call.1} parent=11 // pred_region
          %s187 = ssub.s32 2304, 2304
          %188 = vsyncadd [#allocation7], %s187
          %s189 = sshll.u32 [#allocation6], 4
          %s190 = int_to_ptr.vmem [resolvable:$true] %s189
          %195 = dma.hbm_to_vmem [thread:$0]  %s1, 2304, %s190, [#allocation7], 64, 64, 4
        $region16: #{tpu_custom_call.1} parent=11 // pred_fallthru
          _
        // Predicated region
        $region17: #{tpu_custom_call.1} parent=11 // pred_check
          %p196 = pneg %p100
        $region18: #{tpu_custom_call.1} parent=11 // pred_check_branch
          %198 = sbr.rel (%p196) target = $region20
        $region19: #{tpu_custom_call.1} parent=11 // pred_region
          _
        $region20: #{tpu_custom_call.1} parent=11 // pred_fallthru
          _
        // Predicated region
        $region21: #{tpu_custom_call.1} parent=11 // pred_check
          %p199 = pneg %p121
        $region22: #{tpu_custom_call.1} parent=11 // pred_check_branch
          %201 = sbr.rel (%p199) target = $region24
        $region23: #{tpu_custom_call.1} parent=11 // pred_region
          %s203 = ssub.s32 1024, 1024
          %204 = vsyncadd [#allocation7], %s203
          %s205 = sshll.u32 [#allocation8], 4
          %s206 = int_to_ptr.vmem [resolvable:$true] %s205
          %211 = dma.hbm_to_vmem [thread:$0]  %s3, 1024, %s206, [#allocation7], 64, 64, 4
        $region24: #{tpu_custom_call.1} parent=11 // pred_fallthru
          _
        // Predicated region
        $region25: #{tpu_custom_call.1} parent=11 // pred_check
          %p212 = pneg %p142
        $region26: #{tpu_custom_call.1} parent=11 // pred_check_branch
          %214 = sbr.rel (%p212) target = $region28
        $region27: #{tpu_custom_call.1} parent=11 // pred_region
          _
        $region28: #{tpu_custom_call.1} parent=11 // pred_fallthru
          _
      $region12: #{tpu_custom_call.1} parent=5 // pred_fallthru
        _
      %p215 = scmp.lt.s32.totalorder %s18, 2
      // Predicated region
      $region29: #{tpu_custom_call.1} parent=5 // pred_check
        %p216 = pneg %p215
      $region30: #{tpu_custom_call.1} parent=5 // pred_check_branch
        %218 = sbr.rel (%p216) target = $region32
      $region31: #{tpu_custom_call.1} parent=5 // pred_region
        // Predicated region
        $region33: #{tpu_custom_call.1} parent=31 // pred_check
          %p219 = pneg %p52
        $region34: #{tpu_custom_call.1} parent=31 // pred_check_branch
          %221 = sbr.rel (%p219) target = $region36
        $region35: #{tpu_custom_call.1} parent=31 // pred_region
          %s222 = sand.u32 %s42, 1
          %s223 = scalar_lea.sflag [#allocation4], %s222
          %s224 = sand.u32 %s42, 1
          %s225 = smul.addr %s224, 96
          %s226 = scalar_lea.vmem [#allocation3], %s225
          %s227 = smul.u32 8, %s26
          %s229 = ssub.s32 1536, 1536
          %230 = vsyncadd %s223, %s229
          %s231 = smul.addr %s227, 3
          %s232 = smul.addr %s25, 24
          %s233 = sadd.s32 %s231, %s232
          %s234 = smul.addr %s233, 64
          %s235 = scalar_lea.hbm %s0, %s234
          %s236 = sshll.u32 %s226, 4
          %s237 = int_to_ptr.vmem [resolvable:$true] %s236
          %242 = dma.hbm_to_vmem [thread:$0]  %s235, 1536, %s237, %s223, 192, 192, 12
        $region36: #{tpu_custom_call.1} parent=31 // pred_fallthru
          _
      $region32: #{tpu_custom_call.1} parent=5 // pred_fallthru
        _
      %p243 = scmp.le.s32.totalorder 1, %s18
      %p244 = scmp.lt.s32.totalorder %s18, 3
      %p245 = pnand %p243, %p244
      %p246 = pneg %p245
      // Predicated region
      $region37: #{tpu_custom_call.1} parent=5 // pred_check
        _
      $region38: #{tpu_custom_call.1} parent=5 // pred_check_branch
        %248 = sbr.rel (%p245) target = $region40
      $region39: #{tpu_custom_call.1} parent=5 // pred_region
        %s249 = ssub.s32 %s18, 1
        %s250 = sand.u32 %s45, 1
        %s251 = scalar_lea.sflag [#allocation4], %s250
        %s252 = sand.u32 %s45, 1
        %s253 = smul.addr %s252, 96
        %s254 = scalar_lea.vmem [#allocation3], %s253
        // Predicated region
        $region41: #{tpu_custom_call.1} parent=39 // pred_check
          %p255 = pneg %p58
        $region42: #{tpu_custom_call.1} parent=39 // pred_check_branch
          %257 = sbr.rel (%p255) target = $region44
        $region43: #{tpu_custom_call.1} parent=39 // pred_region
          %258 = dma.done %s251, 1536
        $region44: #{tpu_custom_call.1} parent=39 // pred_fallthru
          _
        // Predicated region
        $region45: #{tpu_custom_call.1} parent=39 // pred_check
          %p259 = pneg %p79
        $region46: #{tpu_custom_call.1} parent=39 // pred_check_branch
          %261 = sbr.rel (%p259) target = $region48
        $region47: #{tpu_custom_call.1} parent=39 // pred_region
          %262 = dma.done [#allocation7], 2304
        $region48: #{tpu_custom_call.1} parent=39 // pred_fallthru
          _
        // Predicated region
        $region49: #{tpu_custom_call.1} parent=39 // pred_check
          %p263 = pneg %p121
        $region50: #{tpu_custom_call.1} parent=39 // pred_check_branch
          %265 = sbr.rel (%p263) target = $region52
        $region51: #{tpu_custom_call.1} parent=39 // pred_region
          %266 = dma.done [#allocation7], 1024
        $region52: #{tpu_custom_call.1} parent=39 // pred_fallthru
          _
        %s267 = sand.u32 %s45, 1
        %s268 = scalar_lea.sflag [#allocation4], %s267
        %s269 = sand.u32 %s45, 1
        %s270 = smul.addr %s269, 96
        %s271 = scalar_lea.vmem [#allocation3], %s270
        %p272 = pneg %p58
        %p273 = pneg %p55
        %p274 = pneg %p79
        %p275 = pneg %p76
        %p276 = pneg %p100
        %p277 = pneg %p97
        %p278 = pneg %p121
        %p279 = pneg %p118
        %p280 = pneg %p142
        %p281 = pneg %p139
        %p282 = pneg %p168
        %p283 = pneg %p165
        %s284 = sand.u32 %s155, 1
        %s285 = scalar_lea.sflag [#allocation5], %s284
        %s286 = sand.u32 %s155, 1
        %s287 = scalar_lea.vmem [#allocation9], %s286
        %s288 = smul.u32 8, %s28
        %p290 = scmp.eq.s32.totalorder %s28, 0
        // Predicated region
        $region53: #{tpu_custom_call.1} parent=39 // pred_check
          %p291 = pneg %p290
        $region54: #{tpu_custom_call.1} parent=39 // pred_check_branch
          %293 = sbr.rel (%p291) target = $region56
        $region55: #{tpu_custom_call.1} parent=39 // pred_region
          %294 = vst [vmem:[#allocation2] sm:$0x1] 0.0
        $region56: #{tpu_custom_call.1} parent=39 // pred_fallthru
          _
        %v295 = vld [vmem:[%s254] sm:$0xff]
        %v296 = vld [vmem:[%s254 + $0x8] sm:$0xf]
        %v297 = vld [vmem:[%s254 + $0xc] sm:$0xff]
        %v298 = vld [vmem:[%s254 + $0x14] sm:$0xf]
        %v299 = vld [vmem:[%s254 + $0x18] sm:$0xff]
        %v300 = vld [vmem:[%s254 + $0x20] sm:$0xf]
        %v301 = vld [vmem:[%s254 + $0x24] sm:$0xff]
        %v302 = vld [vmem:[%s254 + $0x2c] sm:$0xf]
        %v303 = vld [vmem:[%s254 + $0x30] sm:$0xff]
        %v304 = vld [vmem:[%s254 + $0x38] sm:$0xf]
        %v305 = vld [vmem:[%s254 + $0x3c] sm:$0xff]
        %v306 = vld [vmem:[%s254 + $0x44] sm:$0xf]
        %v307 = vld [vmem:[%s254 + $0x48] sm:$0xff]
        %v308 = vld [vmem:[%s254 + $0x50] sm:$0xf]
        %v309 = vld [vmem:[%s254 + $0x54] sm:$0xff]
        %v310 = vld [vmem:[%s254 + $0x5c] sm:$0xf]
        %v311 = vld [vmem:[#allocation6] sm:$0xf]
        %v312 = vld [vmem:[#allocation6 + $0x4] sm:$0xf]
        %v313 = vld [vmem:[#allocation6 + $0x8] sm:$0xf]
        %v314 = vld [vmem:[#allocation6 + $0xc] sm:$0xf]
        %v315 = vld [vmem:[#allocation6 + $0x10] sm:$0xf]
        %v316 = vld [vmem:[#allocation6 + $0x14] sm:$0xf]
        %v317 = vld [vmem:[#allocation6 + $0x18] sm:$0xf]
        %v318 = vld [vmem:[#allocation6 + $0x1c] sm:$0xf]
        %v319 = vld [vmem:[#allocation6 + $0x20] sm:$0xf]
        %v320 = vld [vmem:[#allocation6 + $0x24] sm:$0xf]
        %v321 = vld [vmem:[#allocation6 + $0x28] sm:$0xf]
        %v322 = vld [vmem:[#allocation6 + $0x2c] sm:$0xf]
        %v323 = vld [vmem:[#allocation6 + $0x30] sm:$0xf]
        %v324 = vld [vmem:[#allocation6 + $0x34] sm:$0xf]
        %v325 = vld [vmem:[#allocation6 + $0x38] sm:$0xf]
        %v326 = vld [vmem:[#allocation6 + $0x3c] sm:$0xf]
        %v327 = vld [vmem:[#allocation6 + $0x40] sm:$0xf]
        %v328 = vld [vmem:[#allocation6 + $0x44] sm:$0xf]
        %v329 = vld [vmem:[#allocation6 + $0x48] sm:$0xf]
        %v330 = vld [vmem:[#allocation6 + $0x4c] sm:$0xf]
        %v331 = vld [vmem:[#allocation6 + $0x50] sm:$0xf]
        %v332 = vld [vmem:[#allocation6 + $0x54] sm:$0xf]
        %v333 = vld [vmem:[#allocation6 + $0x58] sm:$0xf]
        %v334 = vld [vmem:[#allocation6 + $0x5c] sm:$0xf]
        %v335 = vld [vmem:[#allocation6 + $0x60] sm:$0xf]
        %v336 = vld [vmem:[#allocation6 + $0x64] sm:$0xf]
        %v337 = vld [vmem:[#allocation6 + $0x68] sm:$0xf]
        %v338 = vld [vmem:[#allocation6 + $0x6c] sm:$0xf]
        %v339 = vld [vmem:[#allocation6 + $0x70] sm:$0xf]
        %v340 = vld [vmem:[#allocation6 + $0x74] sm:$0xf]
        %v341 = vld [vmem:[#allocation6 + $0x78] sm:$0xf]
        %v342 = vld [vmem:[#allocation6 + $0x7c] sm:$0xf]
        %v343 = vld [vmem:[#allocation6 + $0x80] sm:$0xf]
        %v344 = vld [vmem:[#allocation6 + $0x84] sm:$0xf]
        %v345 = vld [vmem:[#allocation6 + $0x88] sm:$0xf]
        %v346 = vld [vmem:[#allocation6 + $0x8c] sm:$0xf]
        %v347 = vld [vmem:[%s2] sm:$0x1]
        %v349 = vlaneseq
        %v350 = vshrl.u32 %v349, 7
        %v351 = vsub.s32 0, %v350
        %v352 = vrot.slane %v347, %v351
        %v370 = vunpack.c.l.b16 %v295
        %v371 = vunpack.c.h.b16 %v295
        %v372 = vunpack.c.l.b16 %v296
        %v373 = vunpack.c.l.b16 %v297
        %v374 = vunpack.c.h.b16 %v297
        %v375 = vunpack.c.l.b16 %v298
        %v376 = vunpack.c.l.b16 %v299
        %v377 = vunpack.c.h.b16 %v299
        %v378 = vunpack.c.l.b16 %v300
        %v379 = vunpack.c.l.b16 %v301
        %v380 = vunpack.c.h.b16 %v301
        %v381 = vunpack.c.l.b16 %v302
        %v382 = vunpack.c.l.b16 %v303
        %v383 = vunpack.c.h.b16 %v303
        %v384 = vunpack.c.l.b16 %v304
        %v385 = vunpack.c.l.b16 %v305
        %v386 = vunpack.c.h.b16 %v305
        %v387 = vunpack.c.l.b16 %v306
        %v388 = vunpack.c.l.b16 %v307
        %v389 = vunpack.c.h.b16 %v307
        %v390 = vunpack.c.l.b16 %v308
        %v391 = vunpack.c.l.b16 %v309
        %v392 = vunpack.c.h.b16 %v309
        %v393 = vunpack.c.l.b16 %v310
        %v394 = vpack.c.b16 %v373, %v370
        %v395 = vpack.c.b16 %v374, %v371
        %v396 = vpack.c.b16 %v375, %v372
        %v397 = vpack.c.b16 %v379, %v376
        %v398 = vpack.c.b16 %v380, %v377
        %v399 = vpack.c.b16 %v381, %v378
        %v400 = vpack.c.b16 %v385, %v382
        %v401 = vpack.c.b16 %v386, %v383
        %v402 = vpack.c.b16 %v387, %v384
        %v403 = vpack.c.b16 %v391, %v388
        %v404 = vpack.c.b16 %v392, %v389
        %v405 = vpack.c.b16 %v393, %v390
        %v450 = vunpack.c.l.b16 %v311
        %v451 = vunpack.c.l.b16 %v312
        %v452 = vunpack.c.l.b16 %v313
        %v453 = vunpack.c.l.b16 %v314
        %v454 = vunpack.c.l.b16 %v315
        %v455 = vunpack.c.l.b16 %v316
        %v456 = vunpack.c.l.b16 %v317
        %v457 = vunpack.c.l.b16 %v318
        %v458 = vunpack.c.l.b16 %v319
        %v459 = vunpack.c.l.b16 %v320
        %v460 = vunpack.c.l.b16 %v321
        %v461 = vunpack.c.l.b16 %v322
        %v462 = vunpack.c.l.b16 %v323
        %v463 = vunpack.c.l.b16 %v324
        %v464 = vunpack.c.l.b16 %v325
        %v465 = vunpack.c.l.b16 %v326
        %v466 = vunpack.c.l.b16 %v327
        %v467 = vunpack.c.l.b16 %v328
        %v468 = vunpack.c.l.b16 %v329
        %v469 = vunpack.c.l.b16 %v330
        %v470 = vunpack.c.l.b16 %v331
        %v471 = vunpack.c.l.b16 %v332
        %v472 = vunpack.c.l.b16 %v333
        %v473 = vunpack.c.l.b16 %v334
        %v474 = vunpack.c.l.b16 %v335
        %v475 = vunpack.c.l.b16 %v336
        %v476 = vunpack.c.l.b16 %v337
        %v477 = vunpack.c.l.b16 %v338
        %v478 = vunpack.c.l.b16 %v339
        %v479 = vunpack.c.l.b16 %v340
        %v480 = vunpack.c.l.b16 %v341
        %v481 = vunpack.c.l.b16 %v342
        %v482 = vunpack.c.l.b16 %v343
        %v483 = vunpack.c.l.b16 %v344
        %v484 = vunpack.c.l.b16 %v345
        %v485 = vunpack.c.l.b16 %v346
        %v486 = vpack.c.b16 %v451, %v450
        %v487 = vpack.c.b16 %v453, %v452
        %v488 = vpack.c.b16 %v455, %v454
        %v489 = vpack.c.b16 %v457, %v456
        %v490 = vpack.c.b16 %v459, %v458
        %v491 = vpack.c.b16 %v461, %v460
        %v492 = vpack.c.b16 %v463, %v462
        %v493 = vpack.c.b16 %v465, %v464
        %v494 = vpack.c.b16 %v467, %v466
        %v495 = vpack.c.b16 %v469, %v468
        %v496 = vpack.c.b16 %v471, %v470
        %v497 = vpack.c.b16 %v473, %v472
        %v498 = vpack.c.b16 %v475, %v474
        %v499 = vpack.c.b16 %v477, %v476
        %v500 = vpack.c.b16 %v479, %v478
        %v501 = vpack.c.b16 %v481, %v480
        %v502 = vpack.c.b16 %v483, %v482
        %v503 = vpack.c.b16 %v485, %v484
        %vm522 = vcmask 261120
        %v524 = vsel %vm522, %v396, 0
        %v527 = vsel %vm522, %v399, 0
        %v530 = vsel %vm522, %v402, 0
        %v533 = vsel %vm522, %v405, 0
        %535 = vmatprep.subr.bf16.mxu0 0
        %536 = vmatpush1.bf16.msra.mxu0 %v486
        %537 = vmatprep.subr.bf16.mxu0 0
        %538 = vmatpush1.bf16.msra.mxu0 %v487
        %539 = vmatprep.subr.bf16.mxu0 0
        %540 = vmatpush1.bf16.msra.mxu0 %v488
        %541 = vmatprep.subr.bf16.mxu0 0
        %542 = vmatpush1.bf16.msra.mxu0 %v489
        %543 = vmatprep.subr.bf16.mxu0 0
        %544 = vmatpush1.bf16.msra.mxu0 %v490
        %545 = vmatprep.subr.bf16.mxu0 0
        %546 = vmatpush1.bf16.msra.mxu0 %v491
        %547 = vmatprep.subr.bf16.mxu0 0
        %548 = vmatpush1.bf16.msra.mxu0 %v492
        %549 = vmatprep.subr.bf16.mxu0 0
        %550 = vmatpush1.bf16.msra.mxu0 %v493
        %551 = vmatprep.subr.bf16.mxu0 0
        %552 = vmatpush1.bf16.msra.mxu0 %v494
        %553 = vmatprep.subr.bf16.mxu0 0
        %554 = vmatpush1.bf16.msra.mxu0 %v495
        %555 = vmatprep.subr.bf16.mxu0 0
        %556 = vmatpush1.bf16.msra.mxu0 %v496
        %557 = vmatprep.subr.bf16.mxu0 0
        %558 = vmatpush1.bf16.msra.mxu0 %v497
        %559 = vmatprep.subr.bf16.mxu0 0
        %560 = vmatpush1.bf16.msra.mxu0 %v498
        %561 = vmatprep.subr.bf16.mxu0 0
        %562 = vmatpush1.bf16.msra.mxu0 %v499
        %563 = vmatprep.subr.bf16.mxu0 0
        %564 = vmatpush1.bf16.msra.mxu0 %v500
        %565 = vmatprep.subr.bf16.mxu0 0
        %566 = vmatpush1.bf16.msra.mxu0 %v501
        %567 = vmatprep.mubr.bf16.mxu0 %v395
        %568 = vmatmul.mubr.bf16.gmra.mrb[0].mxu0 %v394
        %v569 = vpop.f32.mrb[0].mxu0
        %v570 = vadd.f32 %v352, %v569
        %v571 = vpop.f32.mrb[0].mxu0
        %v572 = vpop.f32.mrb[0].mxu0
        %v573 = vadd.f32 %v352, %v572
        %v574 = vpop.f32.mrb[0].mxu0
        %575 = vmatprep.mubr.bf16.mxu0 %v398
        %576 = vmatmul.mubr.bf16.gmra.mrb[0].mxu0 %v397
        %v577 = vpop.f32.mrb[0].mxu0
        %v578 = vadd.f32 %v352, %v577
        %v579 = vpop.f32.mrb[0].mxu0
        %v580 = vpop.f32.mrb[0].mxu0
        %v581 = vadd.f32 %v352, %v580
        %v582 = vpop.f32.mrb[0].mxu0
        %583 = vmatprep.mubr.bf16.mxu0 %v401
        %584 = vmatmul.mubr.bf16.gmra.mrb[0].mxu0 %v400
        %v585 = vpop.f32.mrb[0].mxu0
        %v586 = vadd.f32 %v352, %v585
        %v587 = vpop.f32.mrb[0].mxu0
        %v588 = vpop.f32.mrb[0].mxu0
        %v589 = vadd.f32 %v352, %v588
        %v590 = vpop.f32.mrb[0].mxu0
        %591 = vmatprep.mubr.bf16.mxu0 %v404
        %592 = vmatmul.mubr.bf16.gmra.mrb[0].mxu0 %v403
        %v593 = vpop.f32.mrb[0].mxu0
        %v594 = vadd.f32 %v352, %v593
        %v595 = vpop.f32.mrb[0].mxu0
        %v596 = vpop.f32.mrb[0].mxu0
        %v597 = vadd.f32 %v352, %v596
        %v598 = vpop.f32.mrb[0].mxu0
        %599 = vdwg.mxu0
        %600 = vmatprep.subr.bf16.mxu0 0
        %601 = vmatpush1.bf16.msra.mxu0 %v502
        %602 = vmatprep.subr.bf16.mxu0 0
        %603 = vmatpush1.bf16.msra.mxu0 %v503
        %604 = vmatprep.subr.bf16.mxu0 0
        %605 = vmatpush1.bf16.msra.mxu0 0
        %606 = vmatprep.subr.bf16.mxu0 0
        %607 = vmatpush1.bf16.msra.mxu0 0
        %608 = vmatprep.subr.bf16.mxu0 0
        %609 = vmatpush1.bf16.msra.mxu0 0
        %610 = vmatprep.subr.bf16.mxu0 0
        %611 = vmatpush1.bf16.msra.mxu0 0
        %612 = vmatprep.subr.bf16.mxu0 0
        %613 = vmatpush1.bf16.msra.mxu0 0
        %614 = vmatprep.subr.bf16.mxu0 0
        %615 = vmatpush1.bf16.msra.mxu0 0
        %616 = vmatprep.subr.bf16.mxu0 0
        %617 = vmatpush1.bf16.msra.mxu0 0
        %618 = vmatprep.subr.bf16.mxu0 0
        %619 = vmatpush1.bf16.msra.mxu0 0
        %620 = vmatprep.subr.bf16.mxu0 0
        %621 = vmatpush1.bf16.msra.mxu0 0
        %622 = vmatprep.subr.bf16.mxu0 0
        %623 = vmatpush1.bf16.msra.mxu0 0
        %624 = vmatprep.subr.bf16.mxu0 0
        %625 = vmatpush1.bf16.msra.mxu0 0
        %626 = vmatprep.subr.bf16.mxu0 0
        %627 = vmatpush1.bf16.msra.mxu0 0
        %628 = vmatprep.subr.bf16.mxu0 0
        %629 = vmatpush1.bf16.msra.mxu0 0
        %630 = vmatprep.subr.bf16.mxu0 0
        %631 = vmatpush1.bf16.msra.mxu0 0
        %632 = vmatprep.mubr.bf16.mxu0 0
        %633 = vmatmul.mubr.bf16.gmra.mrb[0].mxu0 %v524
        %v634 = vpop.f32.mrb[0].mxu0
        %v635 = vadd.f32 %v570, %v634
        %v636 = vpop.f32.mrb[0].mxu0
        %v637 = vpop.f32.mrb[0].mxu0
        %v638 = vadd.f32 %v573, %v637
        %v639 = vpop.f32.mrb[0].mxu0
        %640 = vmatprep.mubr.bf16.mxu0 0
        %641 = vmatmul.mubr.bf16.gmra.mrb[0].mxu0 %v527
        %v642 = vpop.f32.mrb[0].mxu0
        %v643 = vadd.f32 %v578, %v642
        %v644 = vpop.f32.mrb[0].mxu0
        %v645 = vpop.f32.mrb[0].mxu0
        %v646 = vadd.f32 %v581, %v645
        %v647 = vpop.f32.mrb[0].mxu0
        %648 = vmatprep.mubr.bf16.mxu0 0
        %649 = vmatmul.mubr.bf16.gmra.mrb[0].mxu0 %v530
        %v650 = vpop.f32.mrb[0].mxu0
        %v651 = vadd.f32 %v586, %v650
        %v652 = vpop.f32.mrb[0].mxu0
        %v653 = vpop.f32.mrb[0].mxu0
        %v654 = vadd.f32 %v589, %v653
        %v655 = vpop.f32.mrb[0].mxu0
        %656 = vmatprep.mubr.bf16.mxu0 0
        %657 = vmatmul.mubr.bf16.gmra.mrb[0].mxu0 %v533
        %v658 = vpop.f32.mrb[0].mxu0
        %v659 = vadd.f32 %v594, %v658
        %v660 = vpop.f32.mrb[0].mxu0
        %v661 = vpop.f32.mrb[0].mxu0
        %v662 = vadd.f32 %v597, %v661
        %v663 = vpop.f32.mrb[0].mxu0
        %664 = vdwg.mxu0
        %v665 = vmax.f32 %v635, 0.0
        %v666 = vmax.f32 %v638, 0.0
        %v667 = vmax.f32 %v643, 0.0
        %v668 = vmax.f32 %v646, 0.0
        %v669 = vmax.f32 %v651, 0.0
        %v670 = vmax.f32 %v654, 0.0
        %v671 = vmax.f32 %v659, 0.0
        %v672 = vmax.f32 %v662, 0.0
        %v673 = vld [vmem:[#allocation2] sm:$0x1]
        %v674 = vadd.f32 %v665, %v666
        %v675 = vadd.f32 %v674, %v667
        %v676 = vadd.f32 %v675, %v668
        %v677 = vadd.f32 %v676, %v669
        %v678 = vadd.f32 %v677, %v670
        %v679 = vadd.f32 %v678, %v671
        %v680 = vadd.f32 %v679, %v672
        %v681 = vrot.slane %v680, 4
        %v682 = vadd.f32 %v680, %v681
        %v683 = vrot.slane %v682, 2
        %v684 = vadd.f32 %v682, %v683
        %v685 = vrot.slane %v684, 1
        %v686 = vadd.f32 %v684, %v685
        %v687 = vadd.f32 %v673, %v686
        %688 = vst [vmem:[#allocation2] sm:$0x1] %v687
        // Predicated region
        $region57: #{tpu_custom_call.1} parent=39 // pred_check
          %p689 = pneg %p290
        $region58: #{tpu_custom_call.1} parent=39 // pred_check_branch
          %691 = sbr.rel (%p689) target = $region60
        $region59: #{tpu_custom_call.1} parent=39 // pred_region
          %v692 = vld [vmem:[#allocation2] sm:$0x1]
          %v693 = vpack.c.bf16 %v692, %v692
          %v694 = vld [vmem:[#allocation8] sm:$0xf]
          %v695 = vld [vmem:[#allocation8 + $0x4] sm:$0xf]
          %v696 = vld [vmem:[#allocation8 + $0x8] sm:$0xf]
          %v697 = vld [vmem:[#allocation8 + $0xc] sm:$0xf]
          %v698 = vld [vmem:[#allocation8 + $0x10] sm:$0xf]
          %v699 = vld [vmem:[#allocation8 + $0x14] sm:$0xf]
          %v700 = vld [vmem:[#allocation8 + $0x18] sm:$0xf]
          %v701 = vld [vmem:[#allocation8 + $0x1c] sm:$0xf]
          %v702 = vld [vmem:[#allocation8 + $0x20] sm:$0xf]
          %v703 = vld [vmem:[#allocation8 + $0x24] sm:$0xf]
          %v704 = vld [vmem:[#allocation8 + $0x28] sm:$0xf]
          %v705 = vld [vmem:[#allocation8 + $0x2c] sm:$0xf]
          %v706 = vld [vmem:[#allocation8 + $0x30] sm:$0xf]
          %v707 = vld [vmem:[#allocation8 + $0x34] sm:$0xf]
          %v708 = vld [vmem:[#allocation8 + $0x38] sm:$0xf]
          %v709 = vld [vmem:[#allocation8 + $0x3c] sm:$0xf]
          %v710 = vld [vmem:[%s4] sm:$0x1]
          %v727 = vunpack.c.l.b16 %v694
          %v728 = vunpack.c.l.b16 %v695
          %v729 = vunpack.c.l.b16 %v696
          %v730 = vunpack.c.l.b16 %v697
          %v731 = vunpack.c.l.b16 %v698
          %v732 = vunpack.c.l.b16 %v699
          %v733 = vunpack.c.l.b16 %v700
          %v734 = vunpack.c.l.b16 %v701
          %v735 = vunpack.c.l.b16 %v702
          %v736 = vunpack.c.l.b16 %v703
          %v737 = vunpack.c.l.b16 %v704
          %v738 = vunpack.c.l.b16 %v705
          %v739 = vunpack.c.l.b16 %v706
          %v740 = vunpack.c.l.b16 %v707
          %v741 = vunpack.c.l.b16 %v708
          %v742 = vunpack.c.l.b16 %v709
          %v743 = vpack.c.b16 %v728, %v727
          %v744 = vpack.c.b16 %v730, %v729
          %v745 = vpack.c.b16 %v732, %v731
          %v746 = vpack.c.b16 %v734, %v733
          %v747 = vpack.c.b16 %v736, %v735
          %v748 = vpack.c.b16 %v738, %v737
          %v749 = vpack.c.b16 %v740, %v739
          %v750 = vpack.c.b16 %v742, %v741
          %759 = vmatprep.subr.bf16.mxu0 0
          %760 = vmatpush1.bf16.msra.mxu0 %v743
          %761 = vmatprep.subr.bf16.mxu0 0
          %762 = vmatpush1.bf16.msra.mxu0 %v744
          %763 = vmatprep.subr.bf16.mxu0 0
          %764 = vmatpush1.bf16.msra.mxu0 %v745
          %765 = vmatprep.subr.bf16.mxu0 0
          %766 = vmatpush1.bf16.msra.mxu0 %v746
          %767 = vmatprep.subr.bf16.mxu0 0
          %768 = vmatpush1.bf16.msra.mxu0 %v747
          %769 = vmatprep.subr.bf16.mxu0 0
          %770 = vmatpush1.bf16.msra.mxu0 %v748
          %771 = vmatprep.subr.bf16.mxu0 0
          %772 = vmatpush1.bf16.msra.mxu0 %v749
          %773 = vmatprep.subr.bf16.mxu0 0
          %774 = vmatpush1.bf16.msra.mxu0 %v750
          %775 = vmatprep.subr.bf16.mxu0 0
          %776 = vmatpush1.bf16.msra.mxu0 0
          %777 = vmatprep.subr.bf16.mxu0 0
          %778 = vmatpush1.bf16.msra.mxu0 0
          %779 = vmatprep.subr.bf16.mxu0 0
          %780 = vmatpush1.bf16.msra.mxu0 0
          %781 = vmatprep.subr.bf16.mxu0 0
          %782 = vmatpush1.bf16.msra.mxu0 0
          %783 = vmatprep.subr.bf16.mxu0 0
          %784 = vmatpush1.bf16.msra.mxu0 0
          %785 = vmatprep.subr.bf16.mxu0 0
          %786 = vmatpush1.bf16.msra.mxu0 0
          %787 = vmatprep.subr.bf16.mxu0 0
          %788 = vmatpush1.bf16.msra.mxu0 0
          %789 = vmatprep.subr.bf16.mxu0 0
          %790 = vmatpush1.bf16.msra.mxu0 0
          %791 = vmatprep.mubr.bf16.mxu0 0
          %792 = vmatmul.mubr.bf16.gmra.mrb[0].mxu0 %v693
          %v793 = vpop.f32.mrb[0].mxu0
          %v794 = vadd.f32 %v710, %v793
          %v795 = vpop.f32.mrb[0].mxu0
          %v796 = vpop.f32.mrb[0].mxu0
          %v797 = vpop.f32.mrb[0].mxu0
          %798 = vdwg.mxu0
          %799 = vst [vmem:[%s287] sm:$0x1] %v794
        $region60: #{tpu_custom_call.1} parent=39 // pred_fallthru
          _
        %s800 = sand.u32 %s155, 1
        %s801 = scalar_lea.sflag [#allocation5], %s800
        %s802 = sand.u32 %s155, 1
        %s803 = scalar_lea.vmem [#allocation9], %s802
        // Predicated region
        $region61: #{tpu_custom_call.1} parent=39 // pred_check
          %p804 = pneg %p165
        $region62: #{tpu_custom_call.1} parent=39 // pred_check_branch
          %806 = sbr.rel (%p804) target = $region64
        $region63: #{tpu_custom_call.1} parent=39 // pred_region
          %s808 = ssub.s32 16, 16
          %809 = vsyncadd %s801, %s808
          %s810 = smul.addr %s27, 16
          %s811 = scalar_lea.hbm %s5, %s810
          %s813 = sshll.u32 %s803, 4
          %s814 = int_to_ptr.vmem [resolvable:$true] %s813
          %816 = dma.vmem_to_hbm [thread:$0]  %s814, 16, %s811, %s801
        $region64: #{tpu_custom_call.1} parent=39 // pred_fallthru
          _
      $region40: #{tpu_custom_call.1} parent=5 // pred_fallthru
        _
      %p817 = scmp.le.s32.totalorder 2, %s18
      // Predicated region
      $region65: #{tpu_custom_call.1} parent=5 // pred_check
        %p818 = pneg %p817
      $region66: #{tpu_custom_call.1} parent=5 // pred_check_branch
        %820 = sbr.rel (%p818) target = $region68
      $region67: #{tpu_custom_call.1} parent=5 // pred_region
        %s821 = ssub.s32 %s18, 2
        // Predicated region
        $region69: #{tpu_custom_call.1} parent=67 // pred_check
          %p822 = pneg %p171
        $region70: #{tpu_custom_call.1} parent=67 // pred_check_branch
          %824 = sbr.rel (%p822) target = $region72
        $region71: #{tpu_custom_call.1} parent=67 // pred_region
          %s825 = sand.u32 %s156, 1
          %s826 = scalar_lea.sflag [#allocation5], %s825
          %s827 = sand.u32 %s156, 1
          %s828 = scalar_lea.vmem [#allocation9], %s827
          %829 = dma.done %s826, 16
        $region72: #{tpu_custom_call.1} parent=67 // pred_fallthru
          _
      $region68: #{tpu_custom_call.1} parent=5 // pred_fallthru
        _
    $region6: #{tpu_custom_call.1} parent=1 // loop_footer
      %s22 = sadd.s32 1, %s18
    $region7: #{tpu_custom_call.1} parent=1 // loop_footer_branch
      %17 = sbr.rel target = $region3
    $region8: #{tpu_custom_call.1} parent=1 // loop_exit
      _
    %830 = vsyncpa [#allocation4], 1
    %s831 = scalar_lea.sflag [#allocation4], 1
    %832 = vsyncpa %s831, 1
    %833 = vsyncpa [#allocation7], 1
    %834 = vsyncpa [#allocation5], 1
    %s835 = scalar_lea.sflag [#allocation5], 1
    %836 = vsyncpa %s835, 1

</llo_original>
